<compile_context>
chip_gen: v5e
topology: v5e:2x2
jax: 0.10.0
libtpu: 0.0.40
codegen_flags: <defaults>
</compile_context>

<pallas_src>
import functools

import numpy as np
import jax
import jax.numpy as jnp
from jax.experimental import pallas as pl
from jax.experimental.pallas import tpu as pltpu

B_BITS = 4  # quantization bit width B of QuantizationLayer(B)


def _vmem_budget():
    """(vmem_limit_bytes, per-block in+out byte budget), generation dependent."""
    phys = None
    try:
        info = pltpu.get_tpu_info()
        phys = getattr(info, "vmem_capacity_bytes", None)
    except Exception:
        phys = None
    if phys is None:
        phys = 64 * 1024 * 1024  # conservative: assume v7x-sized VMEM
    if phys >= 128 * 1024 * 1024:
        # v5e / v6e: 128 MiB physical -> big tiles, high limit.
        return 96 * 1024 * 1024, 20 * 1024 * 1024
    # v7x: 64 MiB per TensorCore -> keep 2x(in+out) well under the limit.
    return 40 * 1024 * 1024, 8 * 1024 * 1024


def _pick_blocks(batch, feat, B, in_itemsize, tile_budget):
    """Choose (bm, bnc, bn): input block (bm, bnc), output block (bm, bn=bnc*B)."""
    # Lane-aligned input-feature block width.  bn = bnc*B is then a multiple of
    # 128 (or the full output width), keeping the output stores lane-dense and
    # guaranteeing bn % B == 0 so input/output block columns stay aligned.
    bnc = 128 if feat >= 128 else feat
    bn = bnc * B

    # Rows: fill the per-block budget; multiple of 8 (sublanes) or the full batch.
    bytes_per_row = bnc * in_itemsize + bn * 4
    bm = max(8, (tile_budget // bytes_per_row) // 8 * 8)
    if bm > batch:
        bm = batch

    # v7x megacore: make sure there are >= 2 grid blocks when the shape allows,
    # otherwise the second TensorCore is idle despite "parallel" semantics.
    n_row_blocks = pl.cdiv(batch, bm)
    n_col_blocks = pl.cdiv(feat, bnc)
    if n_row_blocks * n_col_blocks < 2 and batch >= 16:
        half = ((batch // 2) + 7) // 8 * 8
        if 0 < half < batch:
            bm = half
    return bm, bnc, bn


def _expand_matrices(bnc, B):
    """E[k, c, c*B + k] = 1: scatters bit-plane k into interleaved output lanes."""
    E = np.zeros((B, bnc, bnc * B), dtype=np.float32)
    c = np.arange(bnc)
    for k in range(B):
        E[k, c, c * B + k] = 1.0
    return jnp.asarray(E, dtype=jnp.bfloat16)  # 0/1 exact in bf16


def _quant_bits_kernel(x_ref, e_ref, o_ref, *, B):
    # x_ref: (bm, bnc) input tile; e_ref: (B, bnc, bn) constant expansion matrices
    # (resident in VMEM: constant block index); o_ref: (bm, bn) float32 output tile.
    x = x_ref[...].astype(jnp.float32)
    # torch.round == round-half-to-even; uint8 cast == keep low 8 bits (x >= 0 here).
    q = jnp.round(x * float(2 ** B) - 0.5).astype(jnp.int32) & 0xFF

    out = None
    for k in range(B):  # static unroll over the B bit-planes (MSB first)
        plane = ((q >> (B - 1 - k)) & 1).astype(jnp.bfloat16)     # (bm, bnc) 0/1
        term = jnp.dot(plane, e_ref[k],                           # MXU interleave
                       preferred_element_type=jnp.float32)        # exact 0/1 result
        out = term if out is None else out + term
    o_ref[...] = out


@functools.partial(jax.jit, static_argnames=("B",))
def quantization_layer(x, B=B_BITS):
    """Pallas equivalent of QuantizationLayer(B).forward(x) for 2-D x."""
    batch, feat = x.shape
    out_cols = feat * B

    vmem_limit, tile_budget = _vmem_budget()
    bm, bnc, bn = _pick_blocks(batch, feat, B, x.dtype.itemsize, tile_budget)
    E = _expand_matrices(bnc, B)

    grid = (pl.cdiv(batch, bm), pl.cdiv(feat, bnc))

    return pl.pallas_call(
        functools.partial(_quant_bits_kernel, B=B),
        out_shape=jax.ShapeDtypeStruct((batch, out_cols), jnp.float32),
        grid=grid,
        in_specs=[
            # Output block j covers output cols [j*bn, (j+1)*bn) which map exactly
            # to input cols [j*bnc, (j+1)*bnc): the BlockSpec does the "repeat".
            pl.BlockSpec((bm, bnc), lambda i, j: (i, j)),
            # Constant block -> fetched once, stays resident in VMEM.
            pl.BlockSpec((B, bnc, bn), lambda i, j: (0, 0, 0)),
        ],
        out_specs=pl.BlockSpec((bm, bn), lambda i, j: (i, j)),
        compiler_params=pltpu.CompilerParams(
            dimension_semantics=("parallel", "parallel"),
            vmem_limit_bytes=vmem_limit),
        cost_estimate=pl.CostEstimate(
            flops=2 * batch * out_cols * bnc + 6 * batch * feat,
            transcendentals=0,
            bytes_accessed=batch * feat * x.dtype.itemsize
                           + batch * out_cols * 4
                           + int(E.size) * 2),
    )(x, E)


def _reference(x, B=B_BITS):
    # Pure-JAX reference mirroring the PyTorch code path, for verification.
    step = 2 ** B
    q = jnp.round(x.astype(jnp.float32) * step - 0.5).astype(jnp.int32) & 0xFF
    shifts = jnp.arange(B - 1, -1, -1, dtype=jnp.int32)
    bits = (q[:, :, None] >> shifts[None, None, :]) & 1
    return bits.reshape(x.shape[0], -1).astype(jnp.float32)


if __name__ == "__main__":
    # Small shape matching the module's (batch, features) forward: out = (8, 128).
    key = jax.random.PRNGKey(0)
    batch, feat = 8, 32
    x = jax.random.uniform(key, (batch, feat), dtype=jnp.float32)

    out = jax.block_until_ready(quantization_layer(x, B=B_BITS))
    ref = _reference(x, B=B_BITS)
    assert out.shape == (batch, feat * B_BITS), out.shape
    assert out.dtype == jnp.float32
    assert bool(jnp.all(out == ref)), "mismatch vs reference (small shape)"

    # Exercise the multi-block (grid > 1) path as well: feat divisible by 128.
    x2 = jax.random.uniform(jax.random.PRNGKey(0), (64, 256), dtype=jnp.float32)
    out2 = jax.block_until_ready(quantization_layer(x2, B=B_BITS))
    assert bool(jnp.all(out2 == _reference(x2, B=B_BITS))), "mismatch (tiled shape)"

    print("KERNEL_OK")
</pallas_src>

<mosaic_0001>
module attributes {stable_mosaic.version = 11 : i64} {
  func.func @_quant_bits_kernel(%arg0: i32, %arg1: i32, %arg2: memref<8x32xf32, #tpu.memory_space<vmem>>, %arg3: memref<4x32x128xbf16, #tpu.memory_space<vmem>>, %arg4: memref<8x128xf32, #tpu.memory_space<vmem>>) attributes {dimension_semantics = [#tpu.dimension_semantics<parallel>, #tpu.dimension_semantics<parallel>], iteration_bounds = array<i64: 1, 1>, scalar_prefetch = 0 : i64, scratch_operands = 0 : i64, tpu.core_type = #tpu.core_type<tc>, window_params = [{transform_indices = @transform_0, window_bounds = array<i64: 8, 32>}, {pipeline_mode = #tpu.pipeline_mode<synchronous>, transform_indices = @transform_1, window_bounds = array<i64: 4, 32, 128>}, {transform_indices = @transform_2, window_bounds = array<i64: 8, 128>}]} {
    %c0 = arith.constant 0 : index
    %c0_0 = arith.constant 0 : index
    %0 = vector.load %arg2[%c0, %c0_0] : memref<8x32xf32, #tpu.memory_space<vmem>>, vector<8x32xf32>
    %cst = arith.constant 1.600000e+01 : f32
    %1 = vector.broadcast %cst : f32 to vector<8x32xf32>
    %2 = arith.mulf %0, %1 : vector<8x32xf32>
    %cst_1 = arith.constant 5.000000e-01 : f32
    %3 = vector.broadcast %cst_1 : f32 to vector<8x32xf32>
    %4 = arith.subf %2, %3 : vector<8x32xf32>
    %5 = math.roundeven %4 : vector<8x32xf32>
    %6 = arith.fptosi %5 : vector<8x32xf32> to vector<8x32xi32>
    %c255_i32 = arith.constant 255 : i32
    %7 = vector.broadcast %c255_i32 : i32 to vector<8x32xi32>
    %8 = arith.andi %6, %7 : vector<8x32xi32>
    %c3_i32 = arith.constant 3 : i32
    %9 = vector.broadcast %c3_i32 : i32 to vector<8x32xi32>
    %10 = arith.shrsi %8, %9 : vector<8x32xi32>
    %c1_i32 = arith.constant 1 : i32
    %11 = vector.broadcast %c1_i32 : i32 to vector<8x32xi32>
    %12 = arith.andi %10, %11 : vector<8x32xi32>
    %13 = arith.sitofp %12 : vector<8x32xi32> to vector<8x32xbf16>
    %c0_2 = arith.constant 0 : index
    %c0_3 = arith.constant 0 : index
    %c0_4 = arith.constant 0 : index
    %14 = vector.load %arg3[%c0_2, %c0_3, %c0_4] : memref<4x32x128xbf16, #tpu.memory_space<vmem>>, vector<1x32x128xbf16>
    %15 = vector.shape_cast %14 : vector<1x32x128xbf16> to vector<32x128xbf16>
    %cst_5 = arith.constant dense<0.000000e+00> : vector<8x128xf32>
    %16 = tpu.matmul %13, %15, %cst_5 {dimension_numbers = #tpu.dot_dimension_numbers<[1], [0], [0], [1], [0, 0, 1, 1], [], []>} : vector<8x32xbf16>, vector<32x128xbf16>, vector<8x128xf32> -> vector<8x128xf32>
    %c2_i32 = arith.constant 2 : i32
    %17 = vector.broadcast %c2_i32 : i32 to vector<8x32xi32>
    %18 = arith.shrsi %8, %17 : vector<8x32xi32>
    %c1_i32_6 = arith.constant 1 : i32
    %19 = vector.broadcast %c1_i32_6 : i32 to vector<8x32xi32>
    %20 = arith.andi %18, %19 : vector<8x32xi32>
    %21 = arith.sitofp %20 : vector<8x32xi32> to vector<8x32xbf16>
    %c1 = arith.constant 1 : index
    %c0_7 = arith.constant 0 : index
    %c0_8 = arith.constant 0 : index
    %22 = vector.load %arg3[%c1, %c0_7, %c0_8] : memref<4x32x128xbf16, #tpu.memory_space<vmem>>, vector<1x32x128xbf16>
    %23 = vector.shape_cast %22 : vector<1x32x128xbf16> to vector<32x128xbf16>
    %cst_9 = arith.constant dense<0.000000e+00> : vector<8x128xf32>
    %24 = tpu.matmul %21, %23, %cst_9 {dimension_numbers = #tpu.dot_dimension_numbers<[1], [0], [0], [1], [0, 0, 1, 1], [], []>} : vector<8x32xbf16>, vector<32x128xbf16>, vector<8x128xf32> -> vector<8x128xf32>
    %25 = arith.addf %16, %24 : vector<8x128xf32>
    %c1_i32_10 = arith.constant 1 : i32
    %26 = vector.broadcast %c1_i32_10 : i32 to vector<8x32xi32>
    %27 = arith.shrsi %8, %26 : vector<8x32xi32>
    %c1_i32_11 = arith.constant 1 : i32
    %28 = vector.broadcast %c1_i32_11 : i32 to vector<8x32xi32>
    %29 = arith.andi %27, %28 : vector<8x32xi32>
    %30 = arith.sitofp %29 : vector<8x32xi32> to vector<8x32xbf16>
    %c2 = arith.constant 2 : index
    %c0_12 = arith.constant 0 : index
    %c0_13 = arith.constant 0 : index
    %31 = vector.load %arg3[%c2, %c0_12, %c0_13] : memref<4x32x128xbf16, #tpu.memory_space<vmem>>, vector<1x32x128xbf16>
    %32 = vector.shape_cast %31 : vector<1x32x128xbf16> to vector<32x128xbf16>
    %cst_14 = arith.constant dense<0.000000e+00> : vector<8x128xf32>
    %33 = tpu.matmul %30, %32, %cst_14 {dimension_numbers = #tpu.dot_dimension_numbers<[1], [0], [0], [1], [0, 0, 1, 1], [], []>} : vector<8x32xbf16>, vector<32x128xbf16>, vector<8x128xf32> -> vector<8x128xf32>
    %34 = arith.addf %25, %33 : vector<8x128xf32>
    %c0_i32 = arith.constant 0 : i32
    %35 = vector.broadcast %c0_i32 : i32 to vector<8x32xi32>
    %36 = arith.shrsi %8, %35 : vector<8x32xi32>
    %c1_i32_15 = arith.constant 1 : i32
    %37 = vector.broadcast %c1_i32_15 : i32 to vector<8x32xi32>
    %38 = arith.andi %36, %37 : vector<8x32xi32>
    %39 = arith.sitofp %38 : vector<8x32xi32> to vector<8x32xbf16>
    %c3 = arith.constant 3 : index
    %c0_16 = arith.constant 0 : index
    %c0_17 = arith.constant 0 : index
    %40 = vector.load %arg3[%c3, %c0_16, %c0_17] : memref<4x32x128xbf16, #tpu.memory_space<vmem>>, vector<1x32x128xbf16>
    %41 = vector.shape_cast %40 : vector<1x32x128xbf16> to vector<32x128xbf16>
    %cst_18 = arith.constant dense<0.000000e+00> : vector<8x128xf32>
    %42 = tpu.matmul %39, %41, %cst_18 {dimension_numbers = #tpu.dot_dimension_numbers<[1], [0], [0], [1], [0, 0, 1, 1], [], []>} : vector<8x32xbf16>, vector<32x128xbf16>, vector<8x128xf32> -> vector<8x128xf32>
    %43 = arith.addf %34, %42 : vector<8x128xf32>
    %c0_19 = arith.constant 0 : index
    %c0_20 = arith.constant 0 : index
    %44 = vector.load %arg4[%c0_19, %c0_20] : memref<8x128xf32, #tpu.memory_space<vmem>>, vector<8x128xf32>
    tpu.vector_store %arg4[%c0_19, %c0_20], %43 {strides = array<i32>} : memref<8x128xf32, #tpu.memory_space<vmem>>, vector<8x128xf32>,
    return
  }
  func.func @transform_0(%arg0: i32, %arg1: i32) -> (i32, i32) {
    %c0_i32 = arith.constant 0 : i32
    return %arg0, %arg1 : i32, i32
  }
  func.func @transform_1(%arg0: i32, %arg1: i32) -> (i32, i32, i32) {
    %c0_i32 = arith.constant 0 : i32
    %c0_i32_0 = arith.constant 0 : i32
    %c0_i32_1 = arith.constant 0 : i32
    %c0_i32_2 = arith.constant 0 : i32
    return %c0_i32, %c0_i32_0, %c0_i32_1 : i32, i32, i32
  }
  func.func @transform_2(%arg0: i32, %arg1: i32) -> (i32, i32) {
    %c0_i32 = arith.constant 0 : i32
    return %arg0, %arg1 : i32, i32
  }
}

</mosaic_0001>

<llo_original>
// kernel: quantization_layer.1
$region0: #{quantization_layer.1}
  #allocation0 [shape = 'u32[]', space=smem, size = 0x4, offset = 0x4, fixed_abs, tag = 'smem constant byte address 0x4 - core index']
  #allocation1 [shape = 'u32[72,128]{1,0:T(1,128)}', space=vmem, size = 0x9000, scoped, tag = 'internal scratch']
  %s0 = inlined_call_operand.hbm [shape: f32[8,32], index: 0, kind: input, shape index: {}]
  %s1 = inlined_call_operand.hbm [shape: bf16[4,32,128], index: 1, kind: input, shape index: {}]
  %s2 = inlined_call_operand.hbm [shape: f32[8,128], index: 2, kind: output, shape index: {}]
  %s3 = sld [smem:[#allocation0]]
  $region26: #{quantization_layer.1} parent=0
    _
  %s5 = ssub.s32 1, %s3
  %s6 = scalar_select 0, %s5, %s3
  $region1: #{quantization_layer.1} parent=0
    #allocation2 [shape = 'u8[4096]{0}', space=vmem, size = 0x1000, scoped, tag = 'input window, operand 0, single buffered']
    #allocation3 [shape = 's32[1]{0}', space=sflag, size = 0x4, scoped, tag = 'scoped memory for quantization_layer.1']
    #allocation4 [shape = 's32[1]{0}', space=sflag, size = 0x4, scoped, tag = 'scoped memory for quantization_layer.1']
    #allocation5 [shape = 'u8[32768]{0}', space=vmem, size = 0x8000, scoped, tag = 'input window, operand 1, single buffered']
    #allocation6 [shape = 's32[1]{0}', space=sflag, size = 0x4, scoped, tag = 'scoped memory for quantization_layer.1']
    #allocation7 [shape = 'u8[4096]{0}', space=vmem, size = 0x1000, scoped, tag = 'output window, operand 0, single buffered']
    %7 = vsyncpa [#allocation3], 0
    %8 = vsyncpa [#allocation6], 0
    %9 = vsyncpa [#allocation4], 0
    // Predicated region
    $region2: #{quantization_layer.1} parent=1 // pred_check
      _
    $region3: #{quantization_layer.1} parent=1 // pred_check_branch
      %11 = sbr.rel (0) target = $region5
    $region4: #{quantization_layer.1} parent=1 // pred_region
      %13 = vsyncadd [#allocation3], 0
      %s15 = sshll.u32 %s0, 4
      %s16 = int_to_ptr.hbm [resolvable:$true] %s15
      %s17 = sshll.u32 [#allocation2], 4
      %s18 = int_to_ptr.vmem [resolvable:$true] %s17
      %20 = dma.hbm_to_vmem [thread:$0]  %s16, 128, %s18, [#allocation3]
    $region5: #{quantization_layer.1} parent=1 // pred_fallthru
      _
    // Predicated region
    $region6: #{quantization_layer.1} parent=1 // pred_check
      _
    $region7: #{quantization_layer.1} parent=1 // pred_check_branch
      %22 = sbr.rel (0) target = $region9
    $region8: #{quantization_layer.1} parent=1 // pred_region
      %24 = vsyncadd [#allocation6], 0
      %s25 = sshll.u32 %s1, 4
      %s26 = int_to_ptr.hbm [resolvable:$true] %s25
      %s27 = sshll.u32 [#allocation5], 4
      %s28 = int_to_ptr.vmem [resolvable:$true] %s27
      %33 = dma.hbm_to_vmem [thread:$0]  %s26, 1024, %s28, [#allocation6], 64, 64, 4
    $region9: #{quantization_layer.1} parent=1 // pred_fallthru
      _
    // Predicated region
    $region10: #{quantization_layer.1} parent=1 // pred_check
      _
    $region11: #{quantization_layer.1} parent=1 // pred_check_branch
      %35 = sbr.rel (0) target = $region13
    $region12: #{quantization_layer.1} parent=1 // pred_region
      %37 = dma.done [#allocation3], 128
    $region13: #{quantization_layer.1} parent=1 // pred_fallthru
      _
    // Predicated region
    $region14: #{quantization_layer.1} parent=1 // pred_check
      _
    $region15: #{quantization_layer.1} parent=1 // pred_check_branch
      %39 = sbr.rel (0) target = $region17
    $region16: #{quantization_layer.1} parent=1 // pred_region
      %41 = dma.done [#allocation6], 1024
    $region17: #{quantization_layer.1} parent=1 // pred_fallthru
      _
    %v43 = vld [vmem:[#allocation2] sm:$0xff]
    %v44 = vmul.f32 %v43, 16.0
    %v45 = vsub.f32 %v44, 0.5
    %v46 = vcvt.f32.s32.ties.to.even %v45
    %v47 = vand.u32 %v46, 255
    %v48 = vshra.s32 %v47, 3
    %v49 = vand.u32 %v48, 1
    %v50 = vcvt.s32.f32 %v49
    %v51 = vpack.c.bf16 %v50, %v50
    %v52 = vld [vmem:[#allocation5] sm:$0xf]
    %v53 = vld [vmem:[#allocation5 + $0x4] sm:$0xf]
    %v54 = vld [vmem:[#allocation5 + $0x8] sm:$0xf]
    %v55 = vld [vmem:[#allocation5 + $0xc] sm:$0xf]
    %v56 = vshra.s32 %v47, 2
    %v57 = vand.u32 %v56, 1
    %v58 = vcvt.s32.f32 %v57
    %v59 = vpack.c.bf16 %v58, %v58
    %s60 = scalar_lea.vmem [#allocation5], 16
    %v61 = vld [vmem:[%s60] sm:$0xf]
    %v62 = vld [vmem:[%s60 + $0x4] sm:$0xf]
    %v63 = vld [vmem:[%s60 + $0x8] sm:$0xf]
    %v64 = vld [vmem:[%s60 + $0xc] sm:$0xf]
    %v69 = vunpack.c.l.b16 %v61
    %v70 = vunpack.c.l.b16 %v62
    %v71 = vunpack.c.l.b16 %v63
    %v72 = vunpack.c.l.b16 %v64
    %v73 = vpack.c.b16 %v70, %v69
    %v74 = vpack.c.b16 %v72, %v71
    %vm77 = vcmask 261120
    %v79 = vsel %vm77, %v59, 0
    %81 = vmatpush.bf16.msra.mxu0 0
    %82 = vmatpush.bf16.msra.mxu0 0
    %83 = vmatpush.bf16.msra.mxu0 0
    %84 = vmatpush.bf16.msra.mxu0 0
    %85 = vmatpush.bf16.msra.mxu0 0
    %86 = vmatpush.bf16.msra.mxu0 0
    %87 = vmatpush.bf16.msra.mxu0 %v74
    %88 = vmatpush.bf16.msra.mxu0 %v73
    %89 = vmatmul.bf16.gmra.mxu0 %v79
    %v90 = vpop.f32.mrf.mxu0
    %v91 = vadd.f32 0.0, %v90
    %v92 = vpop.f32.mrf.mxu0
    %93 = vdwg.mxu0
    %v98 = vunpack.c.l.b16 %v52
    %v99 = vunpack.c.l.b16 %v53
    %v100 = vunpack.c.l.b16 %v54
    %v101 = vunpack.c.l.b16 %v55
    %v102 = vpack.c.b16 %v99, %v98
    %v103 = vpack.c.b16 %v101, %v100
    %v107 = vsel %vm77, %v51, 0
    %109 = vmatpush.bf16.msra.mxu0 0
    %110 = vmatpush.bf16.msra.mxu0 0
    %111 = vmatpush.bf16.msra.mxu0 0
    %112 = vmatpush.bf16.msra.mxu0 0
    %113 = vmatpush.bf16.msra.mxu0 0
    %114 = vmatpush.bf16.msra.mxu0 0
    %115 = vmatpush.bf16.msra.mxu0 %v103
    %116 = vmatpush.bf16.msra.mxu0 %v102
    %117 = vmatmul.bf16.gmra.mxu0 %v107
    %v118 = vpop.f32.mrf.mxu0
    %v119 = vadd.f32 %v91, %v118
    %v120 = vpop.f32.mrf.mxu0
    %121 = vdwg.mxu0
    %v122 = vshra.s32 %v47, 1
    %v123 = vand.u32 %v122, 1
    %v124 = vcvt.s32.f32 %v123
    %v125 = vpack.c.bf16 %v124, %v124
    %s126 = scalar_lea.vmem [#allocation5], 32
    %v127 = vld [vmem:[%s126] sm:$0xf]
    %v128 = vld [vmem:[%s126 + $0x4] sm:$0xf]
    %v129 = vld [vmem:[%s126 + $0x8] sm:$0xf]
    %v130 = vld [vmem:[%s126 + $0xc] sm:$0xf]
    %v135 = vunpack.c.l.b16 %v127
    %v136 = vunpack.c.l.b16 %v128
    %v137 = vunpack.c.l.b16 %v129
    %v138 = vunpack.c.l.b16 %v130
    %v139 = vpack.c.b16 %v136, %v135
    %v140 = vpack.c.b16 %v138, %v137
    %v144 = vsel %vm77, %v125, 0
    %146 = vmatpush.bf16.msra.mxu0 0
    %147 = vmatpush.bf16.msra.mxu0 0
    %148 = vmatpush.bf16.msra.mxu0 0
    %149 = vmatpush.bf16.msra.mxu0 0
    %150 = vmatpush.bf16.msra.mxu0 0
    %151 = vmatpush.bf16.msra.mxu0 0
    %152 = vmatpush.bf16.msra.mxu0 %v140
    %153 = vmatpush.bf16.msra.mxu0 %v139
    %154 = vmatmul.bf16.gmra.mxu0 %v144
    %v155 = vpop.f32.mrf.mxu0
    %v156 = vadd.f32 0.0, %v155
    %v157 = vpop.f32.mrf.mxu0
    %158 = vdwg.mxu0
    %v159 = vadd.f32 %v119, %v156
    %v160 = vand.u32 %v47, 1
    %v161 = vcvt.s32.f32 %v160
    %v162 = vpack.c.bf16 %v161, %v161
    %s163 = scalar_lea.vmem [#allocation5], 48
    %v164 = vld [vmem:[%s163] sm:$0xf]
    %v165 = vld [vmem:[%s163 + $0x4] sm:$0xf]
    %v166 = vld [vmem:[%s163 + $0x8] sm:$0xf]
    %v167 = vld [vmem:[%s163 + $0xc] sm:$0xf]
    %v172 = vunpack.c.l.b16 %v164
    %v173 = vunpack.c.l.b16 %v165
    %v174 = vunpack.c.l.b16 %v166
    %v175 = vunpack.c.l.b16 %v167
    %v176 = vpack.c.b16 %v173, %v172
    %v177 = vpack.c.b16 %v175, %v174
    %v181 = vsel %vm77, %v162, 0
    %183 = vmatpush.bf16.msra.mxu0 0
    %184 = vmatpush.bf16.msra.mxu0 0
    %185 = vmatpush.bf16.msra.mxu0 0
    %186 = vmatpush.bf16.msra.mxu0 0
    %187 = vmatpush.bf16.msra.mxu0 0
    %188 = vmatpush.bf16.msra.mxu0 0
    %189 = vmatpush.bf16.msra.mxu0 %v177
    %190 = vmatpush.bf16.msra.mxu0 %v176
    %191 = vmatmul.bf16.gmra.mxu0 %v181
    %v192 = vpop.f32.mrf.mxu0
    %v193 = vadd.f32 0.0, %v192
    %v194 = vpop.f32.mrf.mxu0
    %195 = vdwg.mxu0
    %v196 = vadd.f32 %v159, %v193
    %197 = vst [vmem:[#allocation7] sm:$0xff] %v196
    // Predicated region
    $region18: #{quantization_layer.1} parent=1 // pred_check
      _
    $region19: #{quantization_layer.1} parent=1 // pred_check_branch
      %199 = sbr.rel (0) target = $region21
    $region20: #{quantization_layer.1} parent=1 // pred_region
      %201 = vsyncadd [#allocation4], 0
      %s203 = sshll.u32 [#allocation7], 4
      %s204 = int_to_ptr.vmem [resolvable:$true] %s203
      %s205 = sshll.u32 %s2, 4
      %s206 = int_to_ptr.hbm [resolvable:$true] %s205
      %208 = dma.vmem_to_hbm [thread:$0]  %s204, 128, %s206, [#allocation4]
    $region21: #{quantization_layer.1} parent=1 // pred_fallthru
      _
    // Predicated region
    $region22: #{quantization_layer.1} parent=1 // pred_check
      _
    $region23: #{quantization_layer.1} parent=1 // pred_check_branch
      %210 = sbr.rel (0) target = $region25
    $region24: #{quantization_layer.1} parent=1 // pred_region
      %212 = dma.done [#allocation4], 128
    $region25: #{quantization_layer.1} parent=1 // pred_fallthru
      _
    %213 = vsyncpa [#allocation3], 1
    %214 = vsyncpa [#allocation6], 1
    %215 = vsyncpa [#allocation4], 1

</llo_original>
